<compile_context>
chip_gen: v7x
topology: tpu7x:2x2x1
jax: 0.10.0
libtpu: 0.0.40
codegen_flags: <defaults>
</compile_context>

<pallas_src>
import functools

import jax
import jax.numpy as jnp
from jax import lax
from jax.experimental import pallas as pl
from jax.experimental.pallas import tpu as pltpu


# ---------------------------------------------------------------------------
# Kernels
# ---------------------------------------------------------------------------

def _hybrid_norm_kernel(x_ref, g_ref, b_ref, o_ref, *, ratio, eps):
    """Single-pass kernel: block = (N, TC, HW) -> fused stats + blended affine FMA."""
    n, tc, hw = x_ref.shape
    x = x_ref[...]
    x32 = x.astype(jnp.float32)

    # ---- fused statistics: one squared pass + two lane (HW) reductions ----
    row_sum = jnp.sum(x32, axis=2, keepdims=True)          # (N, TC, 1)
    row_ssq = jnp.sum(x32 * x32, axis=2, keepdims=True)    # (N, TC, 1)

    inv_hw = 1.0 / float(hw)
    inst_mean = row_sum * inv_hw
    inst_var = jnp.maximum(row_ssq * inv_hw - inst_mean * inst_mean, 0.0)
    inst_rstd = lax.rsqrt(inst_var + eps)                   # EUP, tiny shape

    inv_nhw = 1.0 / float(n * hw)
    bn_mean = jnp.sum(row_sum, axis=0, keepdims=True) * inv_nhw   # (1, TC, 1)
    bn_msq = jnp.sum(row_ssq, axis=0, keepdims=True) * inv_nhw
    bn_var = jnp.maximum(bn_msq - bn_mean * bn_mean, 0.0)
    bn_rstd = lax.rsqrt(bn_var + eps)

    # ---- per-channel affine params: vectorized VMEM load, (TC,1) broadcasts ----
    gamma = g_ref[...].astype(jnp.float32)                   # (TC, 1)
    beta = b_ref[...].astype(jnp.float32)                    # (TC, 1)

    # ---- fold IN/BN normalization, ratio blend and BN affine into one FMA ----
    bn_g = (1.0 - ratio) * gamma * bn_rstd                    # (1, TC, 1)
    scale = ratio * inst_rstd + bn_g                          # (N, TC, 1)
    shift = ((1.0 - ratio) * beta
             - ratio * inst_mean * inst_rstd
             - bn_g * bn_mean)                                # (N, TC, 1)

    if x.dtype == jnp.float32:
        o_ref[...] = (x32 * scale + shift).astype(o_ref.dtype)
    else:
        # Sub-32-bit input: keep the big tile in its native dtype (native bf16 VALU
        # on v6e/v7x, half the VMEM); stats / per-row scalars stay f32.
        o_ref[...] = (x * scale.astype(x.dtype) + shift.astype(x.dtype)).astype(o_ref.dtype)


def _stats_kernel(x_ref, sum_ref, ssq_ref):
    """Per-(n, c) sum / sum-of-squares accumulated across an HW-tiled grid axis."""
    h = pl.program_id(1)

    @pl.when(h == 0)
    def _():
        sum_ref[...] = jnp.zeros_like(sum_ref)
        ssq_ref[...] = jnp.zeros_like(ssq_ref)

    x32 = x_ref[...].astype(jnp.float32)
    sum_ref[...] += jnp.sum(x32, axis=2, keepdims=True)
    ssq_ref[...] += jnp.sum(x32 * x32, axis=2, keepdims=True)


def _apply_kernel(x_ref, scale_ref, shift_ref, o_ref):
    """out = x * scale + shift with per-(n, c) scale/shift (already folded)."""
    x = x_ref[...]
    scale = scale_ref[...]
    shift = shift_ref[...]
    if x.dtype == jnp.float32:
        o_ref[...] = (x * scale + shift).astype(o_ref.dtype)
    else:
        o_ref[...] = (x * scale.astype(x.dtype) + shift.astype(x.dtype)).astype(o_ref.dtype)


# ---------------------------------------------------------------------------
# Tiling helpers
# ---------------------------------------------------------------------------

def _vmem_capacity_bytes():
    try:
        return int(pltpu.get_tpu_info().vmem_capacity_bytes)
    except Exception:
        return 64 << 20      # conservative (v7x-sized) default


def _sublane_multiple(dtype):
    # Sub-32-bit dtypes pack along sublanes: f32 -> 8, bf16 -> 16, int8/fp8 -> 32.
    return max(8, 32 // jnp.dtype(dtype).itemsize)


def _block_footprint(n, tc, hw_blk, itemsize):
    # input block + output block (native dtype) + one f32 temporary.
    return n * tc * hw_blk * (2 * itemsize + 4)


def _choose_channel_block(C, N, HW, itemsize, sub, budget):
    valid = [tc for tc in range(1, C + 1)
             if C % tc == 0 and (tc == C or tc % sub == 0)]
    fitting = [tc for tc in valid if _block_footprint(N, tc, HW, itemsize) <= budget]
    if not fitting:
        return None, valid
    steps = lambda tc: C // tc
    # Prefer an even step count >= 4 (balanced work for v7x's 2 TensorCores and room
    # for double buffering), then >= 2 steps, then the largest fitting block.
    for tier in ([tc for tc in fitting if steps(tc) >= 4 and steps(tc) % 2 == 0],
                 [tc for tc in fitting if steps(tc) >= 2],
                 fitting):
        if tier:
            return max(tier), valid
    return max(fitting), valid


def _choose_hw_block(HW, N, tc, itemsize, budget):
    best = None
    for thw in range(128, HW, 128):       # lane-legal divisors of HW
        if HW % thw == 0 and _block_footprint(N, tc, thw, itemsize) <= budget:
            best = thw
    return best


# ---------------------------------------------------------------------------
# pallas_call wrappers
# ---------------------------------------------------------------------------

def _single_pass(x, gamma, beta, ratio, eps, tc, vmem_cap_limit):
    N, C, HW = x.shape
    itemsize = jnp.dtype(x.dtype).itemsize

    in_block = N * tc * HW * itemsize
    # 2x in + 2x out double-buffered + f32 temporary + slack.
    needed = 4 * in_block + N * tc * HW * 4 + (4 << 20)
    vmem_limit = int(min(max(needed, 32 << 20), vmem_cap_limit))

    kernel = functools.partial(_hybrid_norm_kernel, ratio=float(ratio), eps=float(eps))
    cost = pl.CostEstimate(
        flops=6 * N * C * HW,
        transcendentals=2 * N * C,
        bytes_accessed=2 * N * C * HW * itemsize + 2 * C * 4,
    )

    return pl.pallas_call(
        kernel,
        out_shape=jax.ShapeDtypeStruct((N, C, HW), x.dtype),
        grid_spec=pltpu.PrefetchScalarGridSpec(
            num_scalar_prefetch=0,
            grid=(C // tc,),
            in_specs=[
                pl.BlockSpec((N, tc, HW), lambda c: (0, c, 0)),   # x
                pl.BlockSpec((tc, 1), lambda c: (c, 0)),          # gamma (VMEM)
                pl.BlockSpec((tc, 1), lambda c: (c, 0)),          # beta  (VMEM)
            ],
            out_specs=pl.BlockSpec((N, tc, HW), lambda c: (0, c, 0)),
        ),
        compiler_params=pltpu.CompilerParams(
            dimension_semantics=("parallel",),
            vmem_limit_bytes=vmem_limit,
        ),
        cost_estimate=cost,
    )(x, gamma, beta)


def _two_pass(x, gamma, beta, ratio, eps, tc, thw, vmem_cap_limit):
    """Large-feature-map path: HW-tiled stats pass, then HW-tiled apply pass."""
    N, C, HW = x.shape
    itemsize = jnp.dtype(x.dtype).itemsize

    in_block = N * tc * thw * itemsize
    needed = 4 * in_block + N * tc * thw * 4 + (4 << 20)
    vmem_limit = int(min(max(needed, 32 << 20), vmem_cap_limit))

    stats_cost = pl.CostEstimate(
        flops=3 * N * C * HW, transcendentals=0,
        bytes_accessed=N * C * HW * itemsize + 2 * N * C * 4)

    sums, ssqs = pl.pallas_call(
        _stats_kernel,
        out_shape=(jax.ShapeDtypeStruct((N, C, 1), jnp.float32),
                   jax.ShapeDtypeStruct((N, C, 1), jnp.float32)),
        grid_spec=pltpu.PrefetchScalarGridSpec(
            num_scalar_prefetch=0,
            grid=(C // tc, HW // thw),
            in_specs=[pl.BlockSpec((N, tc, thw), lambda c, h: (0, c, h))],
            out_specs=[pl.BlockSpec((N, tc, 1), lambda c, h: (0, c, 0)),
                       pl.BlockSpec((N, tc, 1), lambda c, h: (0, c, 0))],
        ),
        compiler_params=pltpu.CompilerParams(
            dimension_semantics=("parallel", "arbitrary"),
            vmem_limit_bytes=vmem_limit,
        ),
        cost_estimate=stats_cost,
    )(x)

    # Tiny (N*C)-element per-row algebra: fold IN/BN stats, the ratio blend and the
    # BN affine into a single per-(n, c) scale / shift (negligible vs the HBM passes).
    inv_hw = 1.0 / float(HW)
    inv_nhw = 1.0 / float(N * HW)
    inst_mean = sums * inv_hw
    inst_var = jnp.maximum(ssqs * inv_hw - inst_mean * inst_mean, 0.0)
    inst_rstd = lax.rsqrt(inst_var + eps)
    bn_mean = jnp.sum(sums, axis=0, keepdims=True) * inv_nhw
    bn_msq = jnp.sum(ssqs, axis=0, keepdims=True) * inv_nhw
    bn_var = jnp.maximum(bn_msq - bn_mean * bn_mean, 0.0)
    bn_rstd = lax.rsqrt(bn_var + eps)
    g = gamma.reshape(1, C, 1)
    b = beta.reshape(1, C, 1)
    bn_g = (1.0 - ratio) * g * bn_rstd
    scale = (ratio * inst_rstd + bn_g).astype(jnp.float32)            # (N, C, 1)
    shift = ((1.0 - ratio) * b - ratio * inst_mean * inst_rstd
             - bn_g * bn_mean).astype(jnp.float32)                    # (N, C, 1)

    apply_cost = pl.CostEstimate(
        flops=2 * N * C * HW, transcendentals=0,
        bytes_accessed=2 * N * C * HW * itemsize + 2 * N * C * 4)

    return pl.pallas_call(
        _apply_kernel,
        out_shape=jax.ShapeDtypeStruct((N, C, HW), x.dtype),
        grid_spec=pltpu.PrefetchScalarGridSpec(
            num_scalar_prefetch=0,
            grid=(C // tc, HW // thw),
            in_specs=[pl.BlockSpec((N, tc, thw), lambda c, h: (0, c, h)),
                      pl.BlockSpec((N, tc, 1), lambda c, h: (0, c, 0)),
                      pl.BlockSpec((N, tc, 1), lambda c, h: (0, c, 0))],
            out_specs=pl.BlockSpec((N, tc, thw), lambda c, h: (0, c, h)),
        ),
        compiler_params=pltpu.CompilerParams(
            dimension_semantics=("parallel", "parallel"),
            vmem_limit_bytes=vmem_limit,
        ),
        cost_estimate=apply_cost,
    )(x, scale, shift)


def hybrid_normalization(x_nchw, gamma, beta, *, ratio=0.7, eps=1e-5):
    """x_nchw: (N, C, H, W); gamma/beta: (C,) BatchNorm affine params."""
    N, C, H, W = x_nchw.shape
    HW = H * W
    itemsize = jnp.dtype(x_nchw.dtype).itemsize
    sub = _sublane_multiple(x_nchw.dtype)

    # Free, copy-less view -- no HBM transpose round trips.
    x = x_nchw.reshape(N, C, HW)
    gamma2 = jnp.asarray(gamma, jnp.float32).reshape(C, 1)
    beta2 = jnp.asarray(beta, jnp.float32).reshape(C, 1)

    # Generation-aware sizing: v5e/v6e have 128 MiB VMEM per core, v7x has 64 MiB.
    vmem_cap = _vmem_capacity_bytes()
    if vmem_cap >= (96 << 20):
        block_budget, vmem_cap_limit = 10 << 20, 88 << 20
    else:
        block_budget, vmem_cap_limit = 5 << 20, 48 << 20

    tc, valid = _choose_channel_block(C, N, HW, itemsize, sub, block_budget)

    if tc is not None:
        out = _single_pass(x, gamma2, beta2, ratio, eps, tc, vmem_cap_limit)
        return out.reshape(N, C, H, W)

    # Feature map too large to hold a full-HW block: two-phase stats + apply path.
    tc_min = min(valid)
    thw = _choose_hw_block(HW, N, tc_min, itemsize, block_budget)
    if thw is not None:
        out = _two_pass(x, gamma2, beta2, ratio, eps, tc_min, thw, vmem_cap_limit)
        return out.reshape(N, C, H, W)

    # Last resort (HW has no lane-legal divisor): one oversized single-pass block.
    out = _single_pass(x, gamma2, beta2, ratio, eps, tc_min, vmem_cap_limit)
    return out.reshape(N, C, H, W)


# ---------------------------------------------------------------------------
# Reference & test
# ---------------------------------------------------------------------------

def _reference(x, gamma, beta, ratio=0.7, eps=1e-5):
    # Pure-JAX reference matching PyTorch training-mode semantics.
    inst_mean = jnp.mean(x, axis=(2, 3), keepdims=True)
    inst_var = jnp.var(x, axis=(2, 3), keepdims=True)
    inst = (x - inst_mean) / jnp.sqrt(inst_var + eps)
    bn_mean = jnp.mean(x, axis=(0, 2, 3), keepdims=True)
    bn_var = jnp.var(x, axis=(0, 2, 3), keepdims=True)
    bn = (x - bn_mean) / jnp.sqrt(bn_var + eps)
    bn = bn * gamma[None, :, None, None] + beta[None, :, None, None]
    return ratio * inst + (1.0 - ratio) * bn


if __name__ == "__main__":
    key = jax.random.PRNGKey(0)
    kx, kg, kb = jax.random.split(key, 3)

    N, C, H, W = 2, 4, 16, 16
    x = jax.random.normal(kx, (N, C, H, W), dtype=jnp.float32) * 2.0 + 0.5

    # PyTorch BatchNorm2d default affine init: weight=1, bias=0.
    gamma = jnp.ones((C,), dtype=jnp.float32)
    beta = jnp.zeros((C,), dtype=jnp.float32)

    out = jax.block_until_ready(hybrid_normalization(x, gamma, beta, ratio=0.7))
    ref = _reference(x, gamma, beta, ratio=0.7)
    assert out.shape == (N, C, H, W)
    assert jnp.max(jnp.abs(out - ref)) < 1e-4, "mismatch vs reference (default affine)"

    # Extra validation of the folded gamma/beta path with non-trivial affine params.
    gamma2 = jax.random.normal(kg, (C,), dtype=jnp.float32)
    beta2 = jax.random.normal(kb, (C,), dtype=jnp.float32)
    out2 = jax.block_until_ready(hybrid_normalization(x, gamma2, beta2, ratio=0.7))
    ref2 = _reference(x, gamma2, beta2, ratio=0.7)
    assert jnp.max(jnp.abs(out2 - ref2)) < 1e-4, "mismatch vs reference (random affine)"

    print("KERNEL_OK")
</pallas_src>

<mosaic_0001>
module attributes {stable_mosaic.version = 11 : i64} {
  func.func @_hybrid_norm_kernel(%arg0: i32, %arg1: memref<2x4x256xf32, #tpu.memory_space<vmem>>, %arg2: memref<4x1xf32, #tpu.memory_space<vmem>>, %arg3: memref<4x1xf32, #tpu.memory_space<vmem>>, %arg4: memref<2x4x256xf32, #tpu.memory_space<vmem>>) attributes {dimension_semantics = [#tpu.dimension_semantics<parallel>], iteration_bounds = array<i64: 1>, scalar_prefetch = 0 : i64, scratch_operands = 0 : i64, tpu.core_type = #tpu.core_type<tc>, window_params = [{transform_indices = @transform_0, window_bounds = array<i64: 2, 4, 256>}, {transform_indices = @transform_1, window_bounds = array<i64: 4, 1>}, {transform_indices = @transform_2, window_bounds = array<i64: 4, 1>}, {transform_indices = @transform_3, window_bounds = array<i64: 2, 4, 256>}]} {
    %c0 = arith.constant 0 : index
    %c0_0 = arith.constant 0 : index
    %c0_1 = arith.constant 0 : index
    %0 = vector.load %arg1[%c0, %c0_0, %c0_1] : memref<2x4x256xf32, #tpu.memory_space<vmem>>, vector<2x4x256xf32>
    %cst = arith.constant dense<0.000000e+00> : vector<2x4xf32>
    %1 = vector.multi_reduction <add>, %0, %cst [2] : vector<2x4x256xf32> to vector<2x4xf32>
    %2 = vector.shape_cast %1 : vector<2x4xf32> to vector<2x4x1xf32>
    %3 = arith.mulf %0, %0 : vector<2x4x256xf32>
    %cst_2 = arith.constant dense<0.000000e+00> : vector<2x4xf32>
    %4 = vector.multi_reduction <add>, %3, %cst_2 [2] : vector<2x4x256xf32> to vector<2x4xf32>
    %5 = vector.shape_cast %4 : vector<2x4xf32> to vector<2x4x1xf32>
    %cst_3 = arith.constant 3.906250e-03 : f32
    %6 = vector.broadcast %cst_3 : f32 to vector<2x4x1xf32>
    %7 = arith.mulf %2, %6 : vector<2x4x1xf32>
    %cst_4 = arith.constant 3.906250e-03 : f32
    %8 = vector.broadcast %cst_4 : f32 to vector<2x4x1xf32>
    %9 = arith.mulf %5, %8 : vector<2x4x1xf32>
    %10 = arith.mulf %7, %7 : vector<2x4x1xf32>
    %11 = arith.subf %9, %10 : vector<2x4x1xf32>
    %cst_5 = arith.constant 0.000000e+00 : f32
    %12 = vector.broadcast %cst_5 : f32 to vector<2x4x1xf32>
    %13 = arith.maximumf %11, %12 : vector<2x4x1xf32>
    %cst_6 = arith.constant 9.99999974E-6 : f32
    %14 = vector.broadcast %cst_6 : f32 to vector<2x4x1xf32>
    %15 = arith.addf %13, %14 : vector<2x4x1xf32>
    %16 = math.rsqrt %15 : vector<2x4x1xf32>
    %cst_7 = arith.constant dense<0.000000e+00> : vector<4x1xf32>
    %17 = vector.multi_reduction <add>, %2, %cst_7 [0] : vector<2x4x1xf32> to vector<4x1xf32>
    %18 = vector.shape_cast %17 : vector<4x1xf32> to vector<1x4x1xf32>
    %cst_8 = arith.constant 0.001953125 : f32
    %19 = vector.broadcast %cst_8 : f32 to vector<1x4x1xf32>
    %20 = arith.mulf %18, %19 : vector<1x4x1xf32>
    %cst_9 = arith.constant dense<0.000000e+00> : vector<4x1xf32>
    %21 = vector.multi_reduction <add>, %5, %cst_9 [0] : vector<2x4x1xf32> to vector<4x1xf32>
    %22 = vector.shape_cast %21 : vector<4x1xf32> to vector<1x4x1xf32>
    %cst_10 = arith.constant 0.001953125 : f32
    %23 = vector.broadcast %cst_10 : f32 to vector<1x4x1xf32>
    %24 = arith.mulf %22, %23 : vector<1x4x1xf32>
    %25 = arith.mulf %20, %20 : vector<1x4x1xf32>
    %26 = arith.subf %24, %25 : vector<1x4x1xf32>
    %cst_11 = arith.constant 0.000000e+00 : f32
    %27 = vector.broadcast %cst_11 : f32 to vector<1x4x1xf32>
    %28 = arith.maximumf %26, %27 : vector<1x4x1xf32>
    %cst_12 = arith.constant 9.99999974E-6 : f32
    %29 = vector.broadcast %cst_12 : f32 to vector<1x4x1xf32>
    %30 = arith.addf %28, %29 : vector<1x4x1xf32>
    %31 = math.rsqrt %30 : vector<1x4x1xf32>
    %c0_13 = arith.constant 0 : index
    %c0_14 = arith.constant 0 : index
    %32 = vector.load %arg2[%c0_13, %c0_14] : memref<4x1xf32, #tpu.memory_space<vmem>>, vector<4x1xf32>
    %c0_15 = arith.constant 0 : index
    %c0_16 = arith.constant 0 : index
    %33 = vector.load %arg3[%c0_15, %c0_16] : memref<4x1xf32, #tpu.memory_space<vmem>>, vector<4x1xf32>
    %cst_17 = arith.constant 3.000000e-01 : f32
    %34 = vector.broadcast %cst_17 : f32 to vector<4x1xf32>
    %35 = arith.mulf %34, %32 : vector<4x1xf32>
    %36 = vector.shape_cast %35 : vector<4x1xf32> to vector<1x4x1xf32>
    %37 = arith.mulf %36, %31 : vector<1x4x1xf32>
    %cst_18 = arith.constant 0.699999988 : f32
    %38 = vector.broadcast %cst_18 : f32 to vector<2x4x1xf32>
    %39 = arith.mulf %38, %16 : vector<2x4x1xf32>
    %40 = vector.broadcast %37 : vector<1x4x1xf32> to vector<2x4x1xf32>
    %41 = arith.addf %39, %40 : vector<2x4x1xf32>
    %cst_19 = arith.constant 3.000000e-01 : f32
    %42 = vector.broadcast %cst_19 : f32 to vector<4x1xf32>
    %43 = arith.mulf %42, %33 : vector<4x1xf32>
    %cst_20 = arith.constant 0.699999988 : f32
    %44 = vector.broadcast %cst_20 : f32 to vector<2x4x1xf32>
    %45 = arith.mulf %44, %7 : vector<2x4x1xf32>
    %46 = arith.mulf %45, %16 : vector<2x4x1xf32>
    %47 = vector.shape_cast %43 : vector<4x1xf32> to vector<1x4x1xf32>
    %48 = vector.broadcast %47 : vector<1x4x1xf32> to vector<2x4x1xf32>
    %49 = arith.subf %48, %46 : vector<2x4x1xf32>
    %50 = arith.mulf %37, %20 : vector<1x4x1xf32>
    %51 = vector.broadcast %50 : vector<1x4x1xf32> to vector<2x4x1xf32>
    %52 = arith.subf %49, %51 : vector<2x4x1xf32>
    %53 = vector.broadcast %41 : vector<2x4x1xf32> to vector<2x4x256xf32>
    %54 = arith.mulf %0, %53 : vector<2x4x256xf32>
    %55 = vector.broadcast %52 : vector<2x4x1xf32> to vector<2x4x256xf32>
    %56 = arith.addf %54, %55 : vector<2x4x256xf32>
    %c0_21 = arith.constant 0 : index
    %c0_22 = arith.constant 0 : index
    %c0_23 = arith.constant 0 : index
    %57 = vector.load %arg4[%c0_21, %c0_22, %c0_23] : memref<2x4x256xf32, #tpu.memory_space<vmem>>, vector<2x4x256xf32>
    tpu.vector_store %arg4[%c0_21, %c0_22, %c0_23], %56 {strides = array<i32>} : memref<2x4x256xf32, #tpu.memory_space<vmem>>, vector<2x4x256xf32>,
    return
  }
  func.func @transform_0(%arg0: i32) -> (i32, i32, i32) {
    %c0_i32 = arith.constant 0 : i32
    %c0_i32_0 = arith.constant 0 : i32
    %c0_i32_1 = arith.constant 0 : i32
    return %c0_i32, %arg0, %c0_i32_0 : i32, i32, i32
  }
  func.func @transform_1(%arg0: i32) -> (i32, i32) {
    %c0_i32 = arith.constant 0 : i32
    %c0_i32_0 = arith.constant 0 : i32
    return %arg0, %c0_i32 : i32, i32
  }
  func.func @transform_2(%arg0: i32) -> (i32, i32) {
    %c0_i32 = arith.constant 0 : i32
    %c0_i32_0 = arith.constant 0 : i32
    return %arg0, %c0_i32 : i32, i32
  }
  func.func @transform_3(%arg0: i32) -> (i32, i32, i32) {
    %c0_i32 = arith.constant 0 : i32
    %c0_i32_0 = arith.constant 0 : i32
    %c0_i32_1 = arith.constant 0 : i32
    return %c0_i32, %arg0, %c0_i32_0 : i32, i32, i32
  }
}

</mosaic_0001>

<llo_original>
// kernel: tpu_custom_call.1
$region0: #{tpu_custom_call.1}
  #allocation0 [shape = 'u32[]', space=smem, size = 0x4, offset = 0x4, fixed_abs, tag = 'smem constant byte address 0x4 - core index']
  #allocation1 [shape = 'u32[144,128]{1,0:T(1,128)}', space=vmem, size = 0x12000, scoped, tag = 'internal scratch']
  %s0 = inlined_call_operand.hbm [shape: f32[2,4,256], index: 0, kind: input, shape index: {}]
  %s1 = inlined_call_operand.vmem [shape: f32[4,1], index: 1, kind: input, shape index: {}]
  %s2 = inlined_call_operand.vmem [shape: f32[4,1], index: 2, kind: input, shape index: {}]
  %s3 = inlined_call_operand.hbm [shape: f32[2,4,256], index: 3, kind: output, shape index: {}]
  %s4 = sld [smem:[#allocation0]]
  $region26: #{tpu_custom_call.1} parent=0
    _
  %s6 = ssub.s32 1, %s4
  %s7 = scalar_select 0, %s6, %s4
  $region1: #{tpu_custom_call.1} parent=0
    #allocation2 [shape = 'u8[8192]{0}', space=vmem, size = 0x2000, scoped, tag = 'input window, operand 0, single buffered']
    #allocation3 [shape = 's32[1]{0}', space=sflag, size = 0x4, scoped, tag = 'scoped memory for tpu_custom_call.1']
    #allocation4 [shape = 's32[1]{0}', space=sflag, size = 0x4, scoped, tag = 'scoped memory for tpu_custom_call.1']
    #allocation5 [shape = 'u8[8192]{0}', space=vmem, size = 0x2000, scoped, tag = 'output window, operand 0, single buffered']
    %8 = vsyncpa [#allocation3], 0
    %9 = vsyncpa [#allocation4], 0
    // Predicated region
    $region2: #{tpu_custom_call.1} parent=1 // pred_check
      _
    $region3: #{tpu_custom_call.1} parent=1 // pred_check_branch
      %11 = sbr.rel (0) target = $region5
    $region4: #{tpu_custom_call.1} parent=1 // pred_region
      %s13 = ssub.s32 256, 256
      %14 = vsyncadd [#allocation3], %s13
      %s15 = sshll.u32 [#allocation2], 4
      %s16 = int_to_ptr.vmem [resolvable:$true] %s15
      %21 = dma.hbm_to_vmem [thread:$0]  %s0, 256, %s16, [#allocation3], 128, 128, 8
    $region5: #{tpu_custom_call.1} parent=1 // pred_fallthru
      _
    // Predicated region
    $region6: #{tpu_custom_call.1} parent=1 // pred_check
      _
    $region7: #{tpu_custom_call.1} parent=1 // pred_check_branch
      %23 = sbr.rel (0) target = $region9
    $region8: #{tpu_custom_call.1} parent=1 // pred_region
      _
    $region9: #{tpu_custom_call.1} parent=1 // pred_fallthru
      _
    // Predicated region
    $region10: #{tpu_custom_call.1} parent=1 // pred_check
      _
    $region11: #{tpu_custom_call.1} parent=1 // pred_check_branch
      %25 = sbr.rel (0) target = $region13
    $region12: #{tpu_custom_call.1} parent=1 // pred_region
      _
    $region13: #{tpu_custom_call.1} parent=1 // pred_fallthru
      _
    // Predicated region
    $region14: #{tpu_custom_call.1} parent=1 // pred_check
      _
    $region15: #{tpu_custom_call.1} parent=1 // pred_check_branch
      %27 = sbr.rel (0) target = $region17
    $region16: #{tpu_custom_call.1} parent=1 // pred_region
      %28 = dma.done [#allocation3], 256
    $region17: #{tpu_custom_call.1} parent=1 // pred_fallthru
      _
    %v29 = vld [vmem:[#allocation2] sm:$0xff]
    %v30 = vld [vmem:[#allocation2 + $0x8] sm:$0xff]
    %v33 = vcombine.high %v29, %v29
    %v34 = vcombine.high %v30, %v30
    %vm37 = vcmask 1043456
    %v38 = vsel %vm37, %v29, 0.0
    %v39 = vsel %vm37, %v33, 0.0
    %v40 = vadd.f32 %v38, %v39
    %41 = vadd.xlane.f32.xlu0 %v40
    %v42 = vpop.xlane.xlu0 %41
    %v43 = vsel %vm37, %v30, 0.0
    %v44 = vsel %vm37, %v34, 0.0
    %v45 = vadd.f32 %v43, %v44
    %46 = vadd.xlane.f32.xlu0 %v45
    %v47 = vpop.xlane.xlu0 %46
    %v48 = vmul.f32 %v29, %v29
    %v49 = vmul.f32 %v30, %v30
    %v52 = vcombine.high %v48, %v48
    %v53 = vcombine.high %v49, %v49
    %v56 = vsel %vm37, %v48, 0.0
    %v57 = vsel %vm37, %v52, 0.0
    %v58 = vadd.f32 %v56, %v57
    %59 = vadd.xlane.f32.xlu0 %v58
    %v60 = vpop.xlane.xlu0 %59
    %v61 = vsel %vm37, %v49, 0.0
    %v62 = vsel %vm37, %v53, 0.0
    %v63 = vadd.f32 %v61, %v62
    %64 = vadd.xlane.f32.xlu0 %v63
    %v65 = vpop.xlane.xlu0 %64
    %v66 = vmul.f32 %v42, 0.00390625
    %v67 = vmul.f32 %v47, 0.00390625
    %v68 = vmul.f32 %v60, 0.00390625
    %v69 = vmul.f32 %v65, 0.00390625
    %v70 = vmul.f32 %v66, %v66
    %v71 = vmul.f32 %v67, %v67
    %v72 = vsub.f32 %v68, %v70
    %v73 = vsub.f32 %v69, %v71
    %v74 = vmax.f32 %v72, 0.0
    %v75 = vmax.f32 %v73, 0.0
    %v76 = vadd.f32 %v74, 1e-05
    %v77 = vadd.f32 %v75, 1e-05
    %v78 = vrsqrt.pop %v76
    %v79 = vrsqrt.pop %v77
    %v80 = vsel %vm37, %v42, 0.0
    %v81 = vsel %vm37, %v47, 0.0
    %v82 = vadd.f32 %v80, %v81
    %v83 = vmul.f32 %v82, 0.001953125
    %v84 = vsel %vm37, %v60, 0.0
    %v85 = vsel %vm37, %v65, 0.0
    %v86 = vadd.f32 %v84, %v85
    %v87 = vmul.f32 %v86, 0.001953125
    %v88 = vmul.f32 %v83, %v83
    %v89 = vsub.f32 %v87, %v88
    %v90 = vmax.f32 %v89, 0.0
    %v91 = vadd.f32 %v90, 1e-05
    %v92 = vrsqrt.pop %v91
    %v93 = vld [vmem:[%s1] sm:$0xf]
    %v94 = vld [vmem:[%s2] sm:$0xf]
    %v95 = vmul.f32 %v93, 0.3
    %v96 = vmul.f32 %v95, %v92
    %v97 = vmul.f32 %v78, 0.7
    %v98 = vmul.f32 %v79, 0.7
    %v99 = vadd.f32 %v97, %v96
    %v100 = vadd.f32 %v98, %v96
    %v101 = vmul.f32 %v94, 0.3
    %v102 = vmul.f32 %v66, 0.7
    %v103 = vmul.f32 %v67, 0.7
    %v104 = vmul.f32 %v102, %v78
    %v105 = vmul.f32 %v103, %v79
    %v106 = vsub.f32 %v101, %v104
    %v107 = vsub.f32 %v101, %v105
    %v108 = vmul.f32 %v96, %v83
    %v109 = vsub.f32 %v106, %v108
    %v110 = vsub.f32 %v107, %v108
    %112 = vset.pattern.permute.xlu0 0
    %113 = vperm.xlu0 %112, %v99
    %v114 = vpop.permute.xlu0 %113
    %116 = vset.pattern.permute.xlu0 0
    %117 = vperm.xlu0 %116, %v100
    %v118 = vpop.permute.xlu0 %117
    %v120 = vunpack.c.l.s4 839922192
    %v121 = vunpack.c.0.s8 %v120
    %v122 = vlaneseq
    %v123 = vshrl.u32 %v122, 7
    %v124 = vsub.s32 %v121, %v123
    %v125 = vrot.slane %v114, %v124
    %v127 = vunpack.c.l.s4 839922192
    %v128 = vunpack.c.0.s8 %v127
    %v129 = vlaneseq
    %v130 = vshrl.u32 %v129, 7
    %v131 = vsub.s32 %v128, %v130
    %v132 = vrot.slane %v118, %v131
    %v135 = vmul.f32 %v29, %v125
    %v136 = vmul.f32 %v30, %v132
    %138 = vset.pattern.permute.xlu0 0
    %139 = vperm.xlu0 %138, %v109
    %v140 = vpop.permute.xlu0 %139
    %142 = vset.pattern.permute.xlu0 0
    %143 = vperm.xlu0 %142, %v110
    %v144 = vpop.permute.xlu0 %143
    %v146 = vunpack.c.l.s4 839922192
    %v147 = vunpack.c.0.s8 %v146
    %v148 = vlaneseq
    %v149 = vshrl.u32 %v148, 7
    %v150 = vsub.s32 %v147, %v149
    %v151 = vrot.slane %v140, %v150
    %v153 = vunpack.c.l.s4 839922192
    %v154 = vunpack.c.0.s8 %v153
    %v155 = vlaneseq
    %v156 = vshrl.u32 %v155, 7
    %v157 = vsub.s32 %v154, %v156
    %v158 = vrot.slane %v144, %v157
    %v161 = vadd.f32 %v135, %v151
    %v162 = vadd.f32 %v136, %v158
    %163 = vst [vmem:[#allocation5] sm:$0xff] %v161
    %164 = vst [vmem:[#allocation5 + $0x8] sm:$0xff] %v162
    // Predicated region
    $region18: #{tpu_custom_call.1} parent=1 // pred_check
      _
    $region19: #{tpu_custom_call.1} parent=1 // pred_check_branch
      %166 = sbr.rel (0) target = $region21
    $region20: #{tpu_custom_call.1} parent=1 // pred_region
      %s168 = ssub.s32 256, 256
      %169 = vsyncadd [#allocation4], %s168
      %s170 = sshll.u32 [#allocation5], 4
      %s171 = int_to_ptr.vmem [resolvable:$true] %s170
      %176 = dma.vmem_to_hbm [thread:$0]  %s171, 256, %s3, [#allocation4], 128, 128, 8
    $region21: #{tpu_custom_call.1} parent=1 // pred_fallthru
      _
    // Predicated region
    $region22: #{tpu_custom_call.1} parent=1 // pred_check
      _
    $region23: #{tpu_custom_call.1} parent=1 // pred_check_branch
      %178 = sbr.rel (0) target = $region25
    $region24: #{tpu_custom_call.1} parent=1 // pred_region
      %179 = dma.done [#allocation4], 256
    $region25: #{tpu_custom_call.1} parent=1 // pred_fallthru
      _
    %180 = vsyncpa [#allocation3], 1
    %181 = vsyncpa [#allocation4], 1

</llo_original>
